<compile_context>
chip_gen: v6e
topology: v6e:2x2x1
jax: 0.10.0
libtpu: 0.0.40
codegen_flags: <defaults>
</compile_context>

<pallas_src>
import math

import jax
import jax.numpy as jnp
from jax.experimental import pallas as pl
from jax.experimental.pallas import tpu as pltpu

NUM_CLASSES = 2
ROW_ALIGN = 8       # batch-tile alignment (sublane granularity; last partial block is masked anyway)
TB_MAX = 4096       # large M tile to amortize per-grid-step overhead (binding cost is HBM DMA, not MXU)
MIN_GRID = 2        # keep >= 2 grid steps when possible so both v7x TensorCores get work


def mlp_kernel(x_ref, w1_ref, b1_ref, w2_ref, b2_ref, w3_ref, b3_ref, o_ref):
    # bf16 cast on the VPU (input stays f32 in HBM -> single 4 B/elem read, no wrapper cast pass)
    x = x_ref[...].astype(jnp.bfloat16)
    # fc1 + bias + relu   (dropout1 == identity in eval mode)
    h1 = jnp.dot(x, w1_ref[...], preferred_element_type=jnp.float32) + b1_ref[...]
    h1 = jnp.maximum(h1, 0.0)
    # fc2 + bias + relu   (dropout2 == identity in eval mode)
    h2 = jnp.dot(h1.astype(jnp.bfloat16), w2_ref[...], preferred_element_type=jnp.float32) + b2_ref[...]
    h2 = jnp.maximum(h2, 0.0)
    # fc3 -> exact (TB, NUM_CLASSES) f32 output tile
    o_ref[...] = jnp.dot(h2.astype(jnp.bfloat16), w3_ref[...], preferred_element_type=jnp.float32) + b3_ref[...]


def _round_up(n, m):
    return ((n + m - 1) // m) * m


def _vmem_budget():
    """Generation-aware working-set budget: ~24 MiB-class on 64 MiB-VMEM parts (v7x),
    ~48 MiB on 128 MiB parts (v5e/v6e)."""
    cap = 64 << 20
    try:
        info = pltpu.get_tpu_info()
        cap = int(getattr(info, "vmem_capacity_bytes", cap))
    except Exception:
        pass
    return (24 << 20) if cap <= (64 << 20) else (48 << 20)


def _pick_tb(batch, d, out_w, budget_bytes):
    """Batch tile: as large as the VMEM budget allows (f32 x tile + f32 out tile, double-buffered),
    capped by TB_MAX, and capped so the grid keeps >= MIN_GRID steps when the batch allows."""
    per_row = 2 * 4 * d + 2 * 4 * out_w          # double-buffered f32 x tile + f32 out tile
    tb = min(TB_MAX, budget_bytes // max(per_row, 1))
    if batch > MIN_GRID * ROW_ALIGN:
        tb = min(tb, _round_up(pl.cdiv(batch, MIN_GRID), ROW_ALIGN))
    tb = max(ROW_ALIGN, (tb // ROW_ALIGN) * ROW_ALIGN)
    if tb >= batch:
        return batch    # single full block: block dims equal array dims -> (8,128) rule satisfied
    return tb


def mlp_forward(x_nchw, params):
    """x_nchw: (B, C, H, W) float32. Returns (B, NUM_CLASSES) float32."""
    w1, b1, w2, b2, w3, b3 = params
    B = x_nchw.shape[0]
    D = math.prod(x_nchw.shape[1:])
    H1 = w1.shape[1]
    H2 = w2.shape[1]

    # nn.Flatten() only — no dtype cast, no padding copy (kernel casts to bf16 on the VPU).
    x2d = x_nchw.reshape(B, D)
    w1b = w1.astype(jnp.bfloat16)
    w2b = w2.astype(jnp.bfloat16)
    w3b = w3.astype(jnp.bfloat16)

    budget = _vmem_budget()
    TB = _pick_tb(B, D, NUM_CLASSES, budget)
    grid = (pl.cdiv(B, TB),)   # last partial block (if any) has its writes masked by Pallas

    weights_bytes = (w1b.size + w2b.size + w3b.size) * 2 + (b1.size + b2.size + b3.size) * 4
    io_bytes = x2d.size * 4 + B * NUM_CLASSES * 4
    # Working set: double-buffered f32 x/out tiles + resident weights + slack for compiler scratch.
    working_set = 2 * TB * D * 4 + 2 * TB * NUM_CLASSES * 4 + weights_bytes
    vmem_limit = int(max(8 << 20, min(working_set + (4 << 20), budget + (8 << 20))))

    cost = pl.CostEstimate(
        flops=2 * B * (D * H1 + H1 * H2 + H2 * NUM_CLASSES),
        transcendentals=0,
        bytes_accessed=weights_bytes + io_bytes,
    )

    const = lambda shape: pl.BlockSpec(shape, lambda i: (0, 0))
    out = pl.pallas_call(
        mlp_kernel,
        out_shape=jax.ShapeDtypeStruct((B, NUM_CLASSES), jnp.float32),
        grid=grid,
        in_specs=[
            pl.BlockSpec((TB, D), lambda i: (i, 0)),       # x: batch-tiled, pipelined, f32
            const((D, H1)), const((1, H1)),                # w1 / b1: VMEM-resident
            const((H1, H2)), const((1, H2)),               # w2 / b2: VMEM-resident
            const((H2, NUM_CLASSES)), const((1, NUM_CLASSES)),  # w3 / b3: exact width, resident
        ],
        out_specs=pl.BlockSpec((TB, NUM_CLASSES), lambda i: (i, 0)),
        compiler_params=pltpu.CompilerParams(
            dimension_semantics=("parallel",),
            vmem_limit_bytes=vmem_limit,
        ),
        cost_estimate=cost,
    )(x2d, w1b, b1, w2b, b2, w3b, b3)

    return out


def init_params(key, input_size):
    """Deterministic init. Weights stored transposed ((in, out)) vs PyTorch (out, in)
    so the kernel computes x @ W + b directly."""
    k1, k2, k3, k4, k5, k6 = jax.random.split(key, 6)

    def lin(kw, kb, fan_in, fan_out):
        bound = 1.0 / jnp.sqrt(fan_in)
        w = jax.random.uniform(kw, (fan_in, fan_out), jnp.float32, -bound, bound)
        b = jax.random.uniform(kb, (1, fan_out), jnp.float32, -bound, bound)
        return w, b

    w1, b1 = lin(k1, k2, input_size, 128)
    w2, b2 = lin(k3, k4, 128, 64)
    w3, b3 = lin(k5, k6, 64, NUM_CLASSES)
    return (w1, b1, w2, b2, w3, b3)


def reference_forward(x_nchw, params):
    """Plain-JAX reference mirroring the kernel's bf16-matmul / f32-accumulate recipe."""
    w1, b1, w2, b2, w3, b3 = params
    x = x_nchw.reshape(x_nchw.shape[0], -1).astype(jnp.bfloat16)
    h1 = jnp.maximum(
        jnp.dot(x, w1.astype(jnp.bfloat16), preferred_element_type=jnp.float32) + b1, 0.0)
    h2 = jnp.maximum(
        jnp.dot(h1.astype(jnp.bfloat16), w2.astype(jnp.bfloat16),
                preferred_element_type=jnp.float32) + b2, 0.0)
    return jnp.dot(h2.astype(jnp.bfloat16), w3.astype(jnp.bfloat16),
                   preferred_element_type=jnp.float32) + b3


if __name__ == "__main__":
    # Small shapes consistent with the module: input_size = C*H*W = 3*8*8 = 192
    B, C, H, W = 2, 3, 8, 8
    input_size = C * H * W

    key = jax.random.PRNGKey(0)
    kx, kp = jax.random.split(key)
    x = jax.random.normal(kx, (B, C, H, W), jnp.float32)
    params = init_params(kp, input_size)

    out = jax.block_until_ready(mlp_forward(x, params))
    ref = reference_forward(x, params)

    assert out.shape == (B, NUM_CLASSES), out.shape
    assert jnp.allclose(out, ref, atol=1e-2, rtol=1e-2), (out, ref)
    print("KERNEL_OK")
</pallas_src>

<mosaic_0001>
module attributes {stable_mosaic.version = 11 : i64} {
  func.func @mlp_kernel(%arg0: i32, %arg1: memref<2x192xf32, #tpu.memory_space<vmem>>, %arg2: memref<192x128xbf16, #tpu.memory_space<vmem>>, %arg3: memref<1x128xf32, #tpu.memory_space<vmem>>, %arg4: memref<128x64xbf16, #tpu.memory_space<vmem>>, %arg5: memref<1x64xf32, #tpu.memory_space<vmem>>, %arg6: memref<64x2xbf16, #tpu.memory_space<vmem>>, %arg7: memref<1x2xf32, #tpu.memory_space<vmem>>, %arg8: memref<2x2xf32, #tpu.memory_space<vmem>>) attributes {dimension_semantics = [#tpu.dimension_semantics<parallel>], iteration_bounds = array<i64: 1>, scalar_prefetch = 0 : i64, scratch_operands = 0 : i64, tpu.core_type = #tpu.core_type<tc>, window_params = [{transform_indices = @transform_0, window_bounds = array<i64: 2, 192>}, {pipeline_mode = #tpu.pipeline_mode<synchronous>, transform_indices = @transform_1, window_bounds = array<i64: 192, 128>}, {pipeline_mode = #tpu.pipeline_mode<synchronous>, transform_indices = @transform_2, window_bounds = array<i64: 1, 128>}, {pipeline_mode = #tpu.pipeline_mode<synchronous>, transform_indices = @transform_3, window_bounds = array<i64: 128, 64>}, {pipeline_mode = #tpu.pipeline_mode<synchronous>, transform_indices = @transform_4, window_bounds = array<i64: 1, 64>}, {pipeline_mode = #tpu.pipeline_mode<synchronous>, transform_indices = @transform_5, window_bounds = array<i64: 64, 2>}, {pipeline_mode = #tpu.pipeline_mode<synchronous>, transform_indices = @transform_6, window_bounds = array<i64: 1, 2>}, {transform_indices = @transform_7, window_bounds = array<i64: 2, 2>}]} {
    %c0 = arith.constant 0 : index
    %c0_0 = arith.constant 0 : index
    %0 = vector.load %arg1[%c0, %c0_0] : memref<2x192xf32, #tpu.memory_space<vmem>>, vector<2x192xf32>
    %1 = arith.truncf %0 : vector<2x192xf32> to vector<2x192xbf16>
    %c0_1 = arith.constant 0 : index
    %c0_2 = arith.constant 0 : index
    %2 = vector.load %arg2[%c0_1, %c0_2] : memref<192x128xbf16, #tpu.memory_space<vmem>>, vector<192x128xbf16>
    %cst = arith.constant dense<0.000000e+00> : vector<2x128xf32>
    %3 = tpu.matmul %1, %2, %cst {dimension_numbers = #tpu.dot_dimension_numbers<[1], [0], [0], [1], [0, 0, 1, 1], [], []>} : vector<2x192xbf16>, vector<192x128xbf16>, vector<2x128xf32> -> vector<2x128xf32>
    %c0_3 = arith.constant 0 : index
    %c0_4 = arith.constant 0 : index
    %4 = vector.load %arg3[%c0_3, %c0_4] : memref<1x128xf32, #tpu.memory_space<vmem>>, vector<1x128xf32>
    %5 = vector.broadcast %4 : vector<1x128xf32> to vector<2x128xf32>
    %6 = arith.addf %3, %5 : vector<2x128xf32>
    %cst_5 = arith.constant 0.000000e+00 : f32
    %7 = vector.broadcast %cst_5 : f32 to vector<2x128xf32>
    %8 = arith.maximumf %6, %7 : vector<2x128xf32>
    %9 = arith.truncf %8 : vector<2x128xf32> to vector<2x128xbf16>
    %c0_6 = arith.constant 0 : index
    %c0_7 = arith.constant 0 : index
    %10 = vector.load %arg4[%c0_6, %c0_7] : memref<128x64xbf16, #tpu.memory_space<vmem>>, vector<128x64xbf16>
    %cst_8 = arith.constant dense<0.000000e+00> : vector<2x64xf32>
    %11 = tpu.matmul %9, %10, %cst_8 {dimension_numbers = #tpu.dot_dimension_numbers<[1], [0], [0], [1], [0, 0, 1, 1], [], []>} : vector<2x128xbf16>, vector<128x64xbf16>, vector<2x64xf32> -> vector<2x64xf32>
    %c0_9 = arith.constant 0 : index
    %c0_10 = arith.constant 0 : index
    %12 = vector.load %arg5[%c0_9, %c0_10] : memref<1x64xf32, #tpu.memory_space<vmem>>, vector<1x64xf32>
    %13 = vector.broadcast %12 : vector<1x64xf32> to vector<2x64xf32>
    %14 = arith.addf %11, %13 : vector<2x64xf32>
    %cst_11 = arith.constant 0.000000e+00 : f32
    %15 = vector.broadcast %cst_11 : f32 to vector<2x64xf32>
    %16 = arith.maximumf %14, %15 : vector<2x64xf32>
    %17 = arith.truncf %16 : vector<2x64xf32> to vector<2x64xbf16>
    %c0_12 = arith.constant 0 : index
    %c0_13 = arith.constant 0 : index
    %18 = vector.load %arg6[%c0_12, %c0_13] : memref<64x2xbf16, #tpu.memory_space<vmem>>, vector<64x2xbf16>
    %cst_14 = arith.constant dense<0.000000e+00> : vector<2x2xf32>
    %19 = tpu.matmul %17, %18, %cst_14 {dimension_numbers = #tpu.dot_dimension_numbers<[1], [0], [0], [1], [0, 0, 1, 1], [], []>} : vector<2x64xbf16>, vector<64x2xbf16>, vector<2x2xf32> -> vector<2x2xf32>
    %c0_15 = arith.constant 0 : index
    %c0_16 = arith.constant 0 : index
    %20 = vector.load %arg7[%c0_15, %c0_16] : memref<1x2xf32, #tpu.memory_space<vmem>>, vector<1x2xf32>
    %21 = vector.broadcast %20 : vector<1x2xf32> to vector<2x2xf32>
    %22 = arith.addf %19, %21 : vector<2x2xf32>
    %c0_17 = arith.constant 0 : index
    %c0_18 = arith.constant 0 : index
    %23 = vector.load %arg8[%c0_17, %c0_18] : memref<2x2xf32, #tpu.memory_space<vmem>>, vector<2x2xf32>
    tpu.vector_store %arg8[%c0_17, %c0_18], %22 {strides = array<i32>} : memref<2x2xf32, #tpu.memory_space<vmem>>, vector<2x2xf32>,
    return
  }
  func.func @transform_0(%arg0: i32) -> (i32, i32) {
    %c0_i32 = arith.constant 0 : i32
    %c0_i32_0 = arith.constant 0 : i32
    return %arg0, %c0_i32 : i32, i32
  }
  func.func @transform_1(%arg0: i32) -> (i32, i32) {
    %c0_i32 = arith.constant 0 : i32
    %c0_i32_0 = arith.constant 0 : i32
    %c0_i32_1 = arith.constant 0 : i32
    return %c0_i32, %c0_i32_0 : i32, i32
  }
  func.func @transform_2(%arg0: i32) -> (i32, i32) {
    %c0_i32 = arith.constant 0 : i32
    %c0_i32_0 = arith.constant 0 : i32
    %c0_i32_1 = arith.constant 0 : i32
    return %c0_i32, %c0_i32_0 : i32, i32
  }
  func.func @transform_3(%arg0: i32) -> (i32, i32) {
    %c0_i32 = arith.constant 0 : i32
    %c0_i32_0 = arith.constant 0 : i32
    %c0_i32_1 = arith.constant 0 : i32
    return %c0_i32, %c0_i32_0 : i32, i32
  }
  func.func @transform_4(%arg0: i32) -> (i32, i32) {
    %c0_i32 = arith.constant 0 : i32
    %c0_i32_0 = arith.constant 0 : i32
    %c0_i32_1 = arith.constant 0 : i32
    return %c0_i32, %c0_i32_0 : i32, i32
  }
  func.func @transform_5(%arg0: i32) -> (i32, i32) {
    %c0_i32 = arith.constant 0 : i32
    %c0_i32_0 = arith.constant 0 : i32
    %c0_i32_1 = arith.constant 0 : i32
    return %c0_i32, %c0_i32_0 : i32, i32
  }
  func.func @transform_6(%arg0: i32) -> (i32, i32) {
    %c0_i32 = arith.constant 0 : i32
    %c0_i32_0 = arith.constant 0 : i32
    %c0_i32_1 = arith.constant 0 : i32
    return %c0_i32, %c0_i32_0 : i32, i32
  }
  func.func @transform_7(%arg0: i32) -> (i32, i32) {
    %c0_i32 = arith.constant 0 : i32
    %c0_i32_0 = arith.constant 0 : i32
    return %arg0, %c0_i32 : i32, i32
  }
}

</mosaic_0001>

<llo_original>
// kernel: tpu_custom_call.1
$region0: #{tpu_custom_call.1}
  #allocation0 [shape = 'u32[]', space=smem, size = 0x4, offset = 0x4, fixed_abs, tag = 'smem constant byte address 0x4 - core index']
  #allocation1 [shape = 'u32[144,128]{1,0:T(1,128)}', space=vmem, size = 0x12000, scoped, tag = 'internal scratch']
  %s0 = inlined_call_operand.vmem [shape: f32[2,192], index: 0, kind: input, shape index: {}]
  %s1 = inlined_call_operand.vmem [shape: bf16[192,128], index: 1, kind: input, shape index: {}]
  %s2 = inlined_call_operand.vmem [shape: f32[1,128], index: 2, kind: input, shape index: {}]
  %s3 = inlined_call_operand.vmem [shape: bf16[128,64], index: 3, kind: input, shape index: {}]
  %s4 = inlined_call_operand.vmem [shape: f32[1,64], index: 4, kind: input, shape index: {}]
  %s5 = inlined_call_operand.vmem [shape: bf16[64,2], index: 5, kind: input, shape index: {}]
  %s6 = inlined_call_operand.vmem [shape: f32[1,2], index: 6, kind: input, shape index: {}]
  %s7 = inlined_call_operand.hbm [shape: f32[2,2], index: 7, kind: output, shape index: {}]
  %s8 = sld [smem:[#allocation0]]
  $region38: #{tpu_custom_call.1} parent=0
    _
  %s10 = ssub.s32 1, %s8
  %s11 = scalar_select 0, %s10, %s8
  $region1: #{tpu_custom_call.1} parent=0
    #allocation2 [shape = 'u8[1024]{0}', space=vmem, size = 0x400, scoped, tag = 'output window, operand 0, single buffered']
    #allocation3 [shape = 's32[1]{0}', space=sflag, size = 0x4, scoped, tag = 'scoped memory for tpu_custom_call.1']
    %12 = vsyncpa [#allocation3], 0
    // Predicated region
    $region2: #{tpu_custom_call.1} parent=1 // pred_check
      _
    $region3: #{tpu_custom_call.1} parent=1 // pred_check_branch
      %14 = sbr.rel (0) target = $region5
    $region4: #{tpu_custom_call.1} parent=1 // pred_region
      _
    $region5: #{tpu_custom_call.1} parent=1 // pred_fallthru
      _
    // Predicated region
    $region6: #{tpu_custom_call.1} parent=1 // pred_check
      _
    $region7: #{tpu_custom_call.1} parent=1 // pred_check_branch
      %16 = sbr.rel (0) target = $region9
    $region8: #{tpu_custom_call.1} parent=1 // pred_region
      _
    $region9: #{tpu_custom_call.1} parent=1 // pred_fallthru
      _
    // Predicated region
    $region10: #{tpu_custom_call.1} parent=1 // pred_check
      _
    $region11: #{tpu_custom_call.1} parent=1 // pred_check_branch
      %18 = sbr.rel (0) target = $region13
    $region12: #{tpu_custom_call.1} parent=1 // pred_region
      _
    $region13: #{tpu_custom_call.1} parent=1 // pred_fallthru
      _
    // Predicated region
    $region14: #{tpu_custom_call.1} parent=1 // pred_check
      _
    $region15: #{tpu_custom_call.1} parent=1 // pred_check_branch
      %20 = sbr.rel (0) target = $region17
    $region16: #{tpu_custom_call.1} parent=1 // pred_region
      _
    $region17: #{tpu_custom_call.1} parent=1 // pred_fallthru
      _
    // Predicated region
    $region18: #{tpu_custom_call.1} parent=1 // pred_check
      _
    $region19: #{tpu_custom_call.1} parent=1 // pred_check_branch
      %22 = sbr.rel (0) target = $region21
    $region20: #{tpu_custom_call.1} parent=1 // pred_region
      _
    $region21: #{tpu_custom_call.1} parent=1 // pred_fallthru
      _
    // Predicated region
    $region22: #{tpu_custom_call.1} parent=1 // pred_check
      _
    $region23: #{tpu_custom_call.1} parent=1 // pred_check_branch
      %24 = sbr.rel (0) target = $region25
    $region24: #{tpu_custom_call.1} parent=1 // pred_region
      _
    $region25: #{tpu_custom_call.1} parent=1 // pred_fallthru
      _
    // Predicated region
    $region26: #{tpu_custom_call.1} parent=1 // pred_check
      _
    $region27: #{tpu_custom_call.1} parent=1 // pred_check_branch
      %26 = sbr.rel (0) target = $region29
    $region28: #{tpu_custom_call.1} parent=1 // pred_region
      _
    $region29: #{tpu_custom_call.1} parent=1 // pred_fallthru
      _
    %v28 = vld [vmem:[%s0] sm:$0xf]
    %v31 = vunpack.c.l.s4 1983009808
    %v32 = vunpack.c.0.s8 %v31
    %v33 = vlaneseq
    %v34 = vshrl.u32 %v33, 7
    %v35 = vsub.s32 %v32, %v34
    %v36 = vrot.slane %v28, %v35
    %v37 = vcombine.high %v36, %v36
    %v40 = vpack.c.bf16 %v36, %v36
    %v41 = vpack.c.bf16 %v37, %v37
    %v42 = vld [vmem:[%s1] sm:$0xf]
    %v43 = vld [vmem:[%s1 + $0x4] sm:$0xf]
    %v44 = vld [vmem:[%s1 + $0x8] sm:$0xf]
    %v45 = vld [vmem:[%s1 + $0xc] sm:$0xf]
    %v46 = vld [vmem:[%s1 + $0x10] sm:$0xf]
    %v47 = vld [vmem:[%s1 + $0x14] sm:$0xf]
    %v48 = vld [vmem:[%s1 + $0x18] sm:$0xf]
    %v49 = vld [vmem:[%s1 + $0x1c] sm:$0xf]
    %v50 = vld [vmem:[%s1 + $0x20] sm:$0xf]
    %v51 = vld [vmem:[%s1 + $0x24] sm:$0xf]
    %v52 = vld [vmem:[%s1 + $0x28] sm:$0xf]
    %v53 = vld [vmem:[%s1 + $0x2c] sm:$0xf]
    %v54 = vld [vmem:[%s1 + $0x30] sm:$0xf]
    %v55 = vld [vmem:[%s1 + $0x34] sm:$0xf]
    %v56 = vld [vmem:[%s1 + $0x38] sm:$0xf]
    %v57 = vld [vmem:[%s1 + $0x3c] sm:$0xf]
    %v58 = vld [vmem:[%s1 + $0x40] sm:$0xf]
    %v59 = vld [vmem:[%s1 + $0x44] sm:$0xf]
    %v60 = vld [vmem:[%s1 + $0x48] sm:$0xf]
    %v61 = vld [vmem:[%s1 + $0x4c] sm:$0xf]
    %v62 = vld [vmem:[%s1 + $0x50] sm:$0xf]
    %v63 = vld [vmem:[%s1 + $0x54] sm:$0xf]
    %v64 = vld [vmem:[%s1 + $0x58] sm:$0xf]
    %v65 = vld [vmem:[%s1 + $0x5c] sm:$0xf]
    %v66 = vld [vmem:[%s2] sm:$0x1]
    %v68 = vlaneseq
    %v69 = vshrl.u32 %v68, 7
    %v70 = vsub.s32 0, %v69
    %v71 = vrot.slane %v66, %v70
    %v97 = vunpack.c.l.b16 %v42
    %v98 = vunpack.c.l.b16 %v43
    %v99 = vunpack.c.l.b16 %v44
    %v100 = vunpack.c.l.b16 %v45
    %v101 = vunpack.c.l.b16 %v46
    %v102 = vunpack.c.l.b16 %v47
    %v103 = vunpack.c.l.b16 %v48
    %v104 = vunpack.c.l.b16 %v49
    %v105 = vunpack.c.l.b16 %v50
    %v106 = vunpack.c.l.b16 %v51
    %v107 = vunpack.c.l.b16 %v52
    %v108 = vunpack.c.l.b16 %v53
    %v109 = vunpack.c.l.b16 %v54
    %v110 = vunpack.c.l.b16 %v55
    %v111 = vunpack.c.l.b16 %v56
    %v112 = vunpack.c.l.b16 %v57
    %v113 = vunpack.c.l.b16 %v58
    %v114 = vunpack.c.l.b16 %v59
    %v115 = vunpack.c.l.b16 %v60
    %v116 = vunpack.c.l.b16 %v61
    %v117 = vunpack.c.l.b16 %v62
    %v118 = vunpack.c.l.b16 %v63
    %v119 = vunpack.c.l.b16 %v64
    %v120 = vunpack.c.l.b16 %v65
    %v121 = vpack.c.b16 %v98, %v97
    %v122 = vpack.c.b16 %v100, %v99
    %v123 = vpack.c.b16 %v102, %v101
    %v124 = vpack.c.b16 %v104, %v103
    %v125 = vpack.c.b16 %v106, %v105
    %v126 = vpack.c.b16 %v108, %v107
    %v127 = vpack.c.b16 %v110, %v109
    %v128 = vpack.c.b16 %v112, %v111
    %v129 = vpack.c.b16 %v114, %v113
    %v130 = vpack.c.b16 %v116, %v115
    %v131 = vpack.c.b16 %v118, %v117
    %v132 = vpack.c.b16 %v120, %v119
    %vm145 = vcmask 523264
    %v147 = vsel %vm145, %v41, 0
    %149 = vmatprep.subr.bf16.mxu0 0
    %150 = vmatpush1.bf16.msra.mxu0 %v128
    %151 = vmatprep.subr.bf16.mxu0 0
    %152 = vmatpush1.bf16.msra.mxu0 %v127
    %153 = vmatprep.subr.bf16.mxu0 0
    %154 = vmatpush1.bf16.msra.mxu0 %v126
    %155 = vmatprep.subr.bf16.mxu0 0
    %156 = vmatpush1.bf16.msra.mxu0 %v125
    %157 = vmatprep.subr.bf16.mxu0 0
    %158 = vmatpush1.bf16.msra.mxu0 %v124
    %159 = vmatprep.subr.bf16.mxu0 0
    %160 = vmatpush1.bf16.msra.mxu0 %v123
    %161 = vmatprep.subr.bf16.mxu0 0
    %162 = vmatpush1.bf16.msra.mxu0 %v122
    %163 = vmatprep.subr.bf16.mxu0 0
    %164 = vmatpush1.bf16.msra.mxu0 %v121
    %165 = vmatprep.subr.bf16.mxu0 0
    %166 = vmatpush2.bf16.msra.mxu0 0
    %167 = vmatprep.subr.bf16.mxu0 0
    %168 = vmatpush2.bf16.msra.mxu0 0
    %169 = vmatprep.subr.bf16.mxu0 0
    %170 = vmatpush2.bf16.msra.mxu0 0
    %171 = vmatprep.subr.bf16.mxu0 0
    %172 = vmatpush2.bf16.msra.mxu0 0
    %173 = vmatprep.subr.bf16.mxu0 0
    %174 = vmatpush2.bf16.msra.mxu0 %v132
    %175 = vmatprep.subr.bf16.mxu0 0
    %176 = vmatpush2.bf16.msra.mxu0 %v131
    %177 = vmatprep.subr.bf16.mxu0 0
    %178 = vmatpush2.bf16.msra.mxu0 %v130
    %179 = vmatprep.subr.bf16.mxu0 0
    %180 = vmatpush2.bf16.msra.mxu0 %v129
    %181 = vmatprep.mubr.bf16.mxu0 %v147
    %182 = vmatmul.mubr.bf16.gmra.mxu0 %v40
    %v183 = vpop.f32.mrf.mxu0
    %v184 = vadd.f32 %v71, %v183
    %v185 = vpop.f32.mrf.mxu0
    %v186 = vpop.f32.mrf.mxu0
    %v187 = vpop.f32.mrf.mxu0
    %188 = vdwg.mxu0
    %v189 = vmax.f32 %v184, 0.0
    %v190 = vpack.c.bf16 %v189, %v189
    %v191 = vld [vmem:[%s3] sm:$0xf]
    %v192 = vld [vmem:[%s3 + $0x4] sm:$0xf]
    %v193 = vld [vmem:[%s3 + $0x8] sm:$0xf]
    %v194 = vld [vmem:[%s3 + $0xc] sm:$0xf]
    %v195 = vld [vmem:[%s3 + $0x10] sm:$0xf]
    %v196 = vld [vmem:[%s3 + $0x14] sm:$0xf]
    %v197 = vld [vmem:[%s3 + $0x18] sm:$0xf]
    %v198 = vld [vmem:[%s3 + $0x1c] sm:$0xf]
    %v199 = vld [vmem:[%s3 + $0x20] sm:$0xf]
    %v200 = vld [vmem:[%s3 + $0x24] sm:$0xf]
    %v201 = vld [vmem:[%s3 + $0x28] sm:$0xf]
    %v202 = vld [vmem:[%s3 + $0x2c] sm:$0xf]
    %v203 = vld [vmem:[%s3 + $0x30] sm:$0xf]
    %v204 = vld [vmem:[%s3 + $0x34] sm:$0xf]
    %v205 = vld [vmem:[%s3 + $0x38] sm:$0xf]
    %v206 = vld [vmem:[%s3 + $0x3c] sm:$0xf]
    %v207 = vld [vmem:[%s4] sm:$0x1]
    %v209 = vlaneseq
    %v210 = vshrl.u32 %v209, 7
    %v211 = vsub.s32 0, %v210
    %v212 = vrot.slane %v207, %v211
    %v230 = vunpack.c.l.b16 %v191
    %v231 = vunpack.c.l.b16 %v192
    %v232 = vunpack.c.l.b16 %v193
    %v233 = vunpack.c.l.b16 %v194
    %v234 = vunpack.c.l.b16 %v195
    %v235 = vunpack.c.l.b16 %v196
    %v236 = vunpack.c.l.b16 %v197
    %v237 = vunpack.c.l.b16 %v198
    %v238 = vunpack.c.l.b16 %v199
    %v239 = vunpack.c.l.b16 %v200
    %v240 = vunpack.c.l.b16 %v201
    %v241 = vunpack.c.l.b16 %v202
    %v242 = vunpack.c.l.b16 %v203
    %v243 = vunpack.c.l.b16 %v204
    %v244 = vunpack.c.l.b16 %v205
    %v245 = vunpack.c.l.b16 %v206
    %v246 = vpack.c.b16 %v231, %v230
    %v247 = vpack.c.b16 %v233, %v232
    %v248 = vpack.c.b16 %v235, %v234
    %v249 = vpack.c.b16 %v237, %v236
    %v250 = vpack.c.b16 %v239, %v238
    %v251 = vpack.c.b16 %v241, %v240
    %v252 = vpack.c.b16 %v243, %v242
    %v253 = vpack.c.b16 %v245, %v244
    %262 = vmatprep.subr.bf16.mxu0 0
    %263 = vmatpush1.bf16.msra.mxu0 %v253
    %264 = vmatprep.subr.bf16.mxu0 0
    %265 = vmatpush1.bf16.msra.mxu0 %v252
    %266 = vmatprep.subr.bf16.mxu0 0
    %267 = vmatpush1.bf16.msra.mxu0 %v251
    %268 = vmatprep.subr.bf16.mxu0 0
    %269 = vmatpush1.bf16.msra.mxu0 %v250
    %270 = vmatprep.subr.bf16.mxu0 0
    %271 = vmatpush1.bf16.msra.mxu0 %v249
    %272 = vmatprep.subr.bf16.mxu0 0
    %273 = vmatpush1.bf16.msra.mxu0 %v248
    %274 = vmatprep.subr.bf16.mxu0 0
    %275 = vmatpush1.bf16.msra.mxu0 %v247
    %276 = vmatprep.subr.bf16.mxu0 0
    %277 = vmatpush1.bf16.msra.mxu0 %v246
    %278 = vmatprep.subr.bf16.mxu0 0
    %279 = vmatpush2.bf16.msra.mxu0 0
    %280 = vmatprep.subr.bf16.mxu0 0
    %281 = vmatpush2.bf16.msra.mxu0 0
    %282 = vmatprep.subr.bf16.mxu0 0
    %283 = vmatpush2.bf16.msra.mxu0 0
    %284 = vmatprep.subr.bf16.mxu0 0
    %285 = vmatpush2.bf16.msra.mxu0 0
    %286 = vmatprep.subr.bf16.mxu0 0
    %287 = vmatpush2.bf16.msra.mxu0 0
    %288 = vmatprep.subr.bf16.mxu0 0
    %289 = vmatpush2.bf16.msra.mxu0 0
    %290 = vmatprep.subr.bf16.mxu0 0
    %291 = vmatpush2.bf16.msra.mxu0 0
    %292 = vmatprep.subr.bf16.mxu0 0
    %293 = vmatpush2.bf16.msra.mxu0 0
    %294 = vmatprep.mubr.bf16.mxu0 0
    %295 = vmatmul.mubr.bf16.gmra.mxu0 %v190
    %v296 = vpop.f32.mrf.mxu0
    %v297 = vadd.f32 %v212, %v296
    %v298 = vpop.f32.mrf.mxu0
    %v299 = vpop.f32.mrf.mxu0
    %v300 = vpop.f32.mrf.mxu0
    %301 = vdwg.mxu0
    %v302 = vmax.f32 %v297, 0.0
    %v303 = vpack.c.bf16 %v302, %v302
    %v304 = vld [vmem:[%s5] sm:$0xf]
    %v305 = vld [vmem:[%s5 + $0x4] sm:$0xf]
    %v306 = vld [vmem:[%s5 + $0x8] sm:$0xf]
    %v307 = vld [vmem:[%s5 + $0xc] sm:$0xf]
    %v308 = vld [vmem:[%s5 + $0x10] sm:$0xf]
    %v309 = vld [vmem:[%s5 + $0x14] sm:$0xf]
    %v310 = vld [vmem:[%s5 + $0x18] sm:$0xf]
    %v311 = vld [vmem:[%s5 + $0x1c] sm:$0xf]
    %v312 = vld [vmem:[%s6] sm:$0x1]
    %v314 = vlaneseq
    %v315 = vshrl.u32 %v314, 7
    %v316 = vsub.s32 0, %v315
    %v317 = vrot.slane %v312, %v316
    %v327 = vunpack.c.l.b16 %v304
    %v328 = vunpack.c.l.b16 %v305
    %v329 = vunpack.c.l.b16 %v306
    %v330 = vunpack.c.l.b16 %v307
    %v331 = vunpack.c.l.b16 %v308
    %v332 = vunpack.c.l.b16 %v309
    %v333 = vunpack.c.l.b16 %v310
    %v334 = vunpack.c.l.b16 %v311
    %v335 = vpack.c.b16 %v328, %v327
    %v336 = vpack.c.b16 %v330, %v329
    %v337 = vpack.c.b16 %v332, %v331
    %v338 = vpack.c.b16 %v334, %v333
    %v344 = vsel %vm145, %v303, 0
    %346 = vmatprep.subr.bf16.mxu0 0
    %347 = vmatpush1.bf16.msra.mxu0 0
    %348 = vmatprep.subr.bf16.mxu0 0
    %349 = vmatpush1.bf16.msra.mxu0 0
    %350 = vmatprep.subr.bf16.mxu0 0
    %351 = vmatpush1.bf16.msra.mxu0 0
    %352 = vmatprep.subr.bf16.mxu0 0
    %353 = vmatpush1.bf16.msra.mxu0 0
    %354 = vmatprep.subr.bf16.mxu0 0
    %355 = vmatpush1.bf16.msra.mxu0 %v338
    %356 = vmatprep.subr.bf16.mxu0 0
    %357 = vmatpush1.bf16.msra.mxu0 %v337
    %358 = vmatprep.subr.bf16.mxu0 0
    %359 = vmatpush1.bf16.msra.mxu0 %v336
    %360 = vmatprep.subr.bf16.mxu0 0
    %361 = vmatpush1.bf16.msra.mxu0 %v335
    %362 = vmatprep.subr.bf16.mxu0 0
    %363 = vmatpush2.bf16.msra.mxu0 0
    %364 = vmatprep.subr.bf16.mxu0 0
    %365 = vmatpush2.bf16.msra.mxu0 0
    %366 = vmatprep.subr.bf16.mxu0 0
    %367 = vmatpush2.bf16.msra.mxu0 0
    %368 = vmatprep.subr.bf16.mxu0 0
    %369 = vmatpush2.bf16.msra.mxu0 0
    %370 = vmatprep.subr.bf16.mxu0 0
    %371 = vmatpush2.bf16.msra.mxu0 0
    %372 = vmatprep.subr.bf16.mxu0 0
    %373 = vmatpush2.bf16.msra.mxu0 0
    %374 = vmatprep.subr.bf16.mxu0 0
    %375 = vmatpush2.bf16.msra.mxu0 0
    %376 = vmatprep.subr.bf16.mxu0 0
    %377 = vmatpush2.bf16.msra.mxu0 0
    %378 = vmatprep.mubr.bf16.mxu0 0
    %379 = vmatmul.mubr.bf16.gmra.mxu0 %v344
    %v380 = vpop.f32.mrf.mxu0
    %v381 = vadd.f32 %v317, %v380
    %v382 = vpop.f32.mrf.mxu0
    %v383 = vpop.f32.mrf.mxu0
    %v384 = vpop.f32.mrf.mxu0
    %385 = vdwg.mxu0
    %vm386 = vcmask 9216
    %387 = vst.msk [vmem:[#allocation2] sm:$0x3] %vm386, %v381
    // Predicated region
    $region30: #{tpu_custom_call.1} parent=1 // pred_check
      _
    $region31: #{tpu_custom_call.1} parent=1 // pred_check_branch
      %389 = sbr.rel (0) target = $region33
    $region32: #{tpu_custom_call.1} parent=1 // pred_region
      %s391 = ssub.s32 32, 32
      %392 = vsyncadd [#allocation3], %s391
      %s394 = sshll.u32 [#allocation2], 4
      %s395 = int_to_ptr.vmem [resolvable:$true] %s394
      %397 = dma.vmem_to_hbm [thread:$0]  %s395, 32, %s7, [#allocation3]
    $region33: #{tpu_custom_call.1} parent=1 // pred_fallthru
      _
    // Predicated region
    $region34: #{tpu_custom_call.1} parent=1 // pred_check
      _
    $region35: #{tpu_custom_call.1} parent=1 // pred_check_branch
      %399 = sbr.rel (0) target = $region37
    $region36: #{tpu_custom_call.1} parent=1 // pred_region
      %400 = dma.done [#allocation3], 32
    $region37: #{tpu_custom_call.1} parent=1 // pred_fallthru
      _
    %401 = vsyncpa [#allocation3], 1

</llo_original>
